<compile_context>
chip_gen: v5e
topology: v5e:2x2
jax: 0.10.0
libtpu: 0.0.40
codegen_flags: <defaults>
</compile_context>

<pallas_src>
import functools

import jax
import jax.numpy as jnp
from jax import lax
from jax.experimental import pallas as pl
from jax.experimental.pallas import tpu as pltpu


# ---------------------------------------------------------------------------
# Pass 1: normalize + std term (+ bf16 cast / feature padding)
# ---------------------------------------------------------------------------
def _prep_kernel(fvec_ref, xn_ref, std_ref, *, n_valid_cols):
    x = fvec_ref[...].astype(jnp.float32)            # (N, Dp); padded cols are 0
    n_rows = x.shape[0]

    # norml2: row-wise L2 normalization (zero padding does not change norms).
    inv_norm = lax.rsqrt(jnp.sum(x * x, axis=1, keepdims=True))
    xn = x * inv_norm
    xn_ref[...] = xn.astype(jnp.bfloat16)            # MXU operand for pass 2

    # 1 - unbiased std over the batch dim, summed over *real* feature columns.
    # One-pass variance: var = (sum(x^2) - N*mean^2) / (N - 1).
    n = jnp.float32(n_rows)
    s1 = jnp.sum(xn, axis=0, keepdims=True)          # (1, Dp)
    s2 = jnp.sum(xn * xn, axis=0, keepdims=True)     # (1, Dp)
    mean = s1 * (1.0 / n)
    var = (s2 - n * mean * mean) * (1.0 / (n - 1.0))
    std = jnp.sqrt(jnp.maximum(var, 0.0))
    col = lax.broadcasted_iota(jnp.int32, std.shape, 1)
    std_term = jnp.sum(jnp.where(col < n_valid_cols, 1.0 - std, 0.0))
    std_ref[...] = std_term.reshape(1, 1)


# ---------------------------------------------------------------------------
# Pass 2: row-tiled similarity / masked log-softmax / threshold statistics
# ---------------------------------------------------------------------------
def _npairs_tile_kernel(xn_full_ref, xn_tile_ref, lab_col_ref, lab_row_ref,
                        out_ref, *, sigma, th):
    n = xn_full_ref.shape[0]
    tm = xn_tile_ref.shape[0]
    row_start = pl.program_id(0) * tm                # first global row of tile

    # MXU: bf16 operands, f32 accumulate -> (TM, N) similarity slab.
    sim = lax.dot_general(xn_tile_ref[...], xn_full_ref[...],
                          (((1,), (1,)), ((), ())),
                          preferred_element_type=jnp.float32)

    local_row = lax.broadcasted_iota(jnp.int32, (tm, n), 0)
    col = lax.broadcasted_iota(jnp.int32, (tm, n), 1)
    grow = local_row + row_start                     # global row indices
    eye = grow == col
    d = jnp.where(eye, jnp.float32(-1.0), sim)       # distMC: diag = -norm

    # Label masks (Mat): Same = same label off-diagonal, Diff = different label.
    same_label = lab_col_ref[...] == lab_row_ref[...]   # (TM,1)==(1,N)->(TM,N)
    same = same_label & jnp.logical_not(eye)
    # Anchor mask M: even rows (deterministic stand-in for the original's
    # uninitialized ByteTensor).
    sel = same & ((grow & 1) == 0)

    # -log_softmax(d/sigma, dim=1) summed over (Same & M) without building the
    # (TM, N) neg_logp temp:  loss = sum_r cnt_sel_r * lse_r - sum(sel*logits).
    inv_sigma = 1.0 / float(sigma)
    logits = d * jnp.float32(inv_sigma)
    if inv_sigma <= 50.0:
        # Rows are L2-normalized -> |logits| <= ~1/sigma, exp() safe in f32,
        # so the row-max pass (extra XLU reduce + broadcast sub) is skipped.
        lse = jnp.log(jnp.sum(jnp.exp(logits), axis=1, keepdims=True))
    else:
        m = jnp.max(logits, axis=1, keepdims=True)
        lse = jnp.log(jnp.sum(jnp.exp(logits - m), axis=1, keepdims=True)) + m
    sel_cnt_row = jnp.sum(jnp.where(sel, 1.0, 0.0), axis=1, keepdims=True)
    loss_p = jnp.sum(sel_cnt_row * lse) - jnp.sum(jnp.where(sel, logits, 0.0))

    # Threshold statistics.  Diff-related sums derived analytically:
    #   same_label count in tile = same_cnt + TM (diagonal entries)
    #   diff_cnt  = TM*N - TM - same_cnt
    #   diff_hits = hits_total - same_hits - diag_hits
    # (diag d == -1 always "hits" when th > -1; compile-time constant).
    hits = d < jnp.float32(th)
    same_cnt = jnp.sum(jnp.where(same, 1.0, 0.0))
    same_hits = jnp.sum(jnp.where(same & hits, 1.0, 0.0))
    hits_total = jnp.sum(jnp.where(hits, 1.0, 0.0))
    diag_hits = float(tm) if (-1.0 < float(th)) else 0.0
    diff_hits = hits_total - same_hits - diag_hits
    diff_cnt = float(tm * (n - 1)) - same_cnt

    # Lane-dense partial-sum row (lanes 0..4), broadcast over 8 sublanes so the
    # store is a full aligned (8,128) write instead of masked (1,1) stores.
    lane = lax.broadcasted_iota(jnp.int32, (8, 128), 1)
    row = jnp.zeros((8, 128), jnp.float32)
    row = jnp.where(lane == 0, loss_p, row)
    row = jnp.where(lane == 1, same_hits, row)
    row = jnp.where(lane == 2, diff_hits, row)
    row = jnp.where(lane == 3, same_cnt, row)
    row = jnp.where(lane == 4, diff_cnt, row)
    out_ref[0] = row


# ---------------------------------------------------------------------------
# Wrapper
# ---------------------------------------------------------------------------
def _vmem_capacity_bytes(default=64 << 20):
    try:
        cap = getattr(pltpu.get_tpu_info(), "vmem_capacity_bytes", None)
        return int(cap) if cap else default
    except Exception:
        return default


def _compiler_params(needed_bytes, grid_parallel=False):
    cap = _vmem_capacity_bytes()                      # 64 MiB on v7x, 128 on v5e/v6e
    limit = int(min(max(needed_bytes, 32 << 20), (cap * 3) // 4))
    sems = ("parallel",) if grid_parallel else None
    return pltpu.CompilerParams(dimension_semantics=sems, vmem_limit_bytes=limit)


def _pick_block_rows(n, requested=None):
    if requested is not None:
        if n % requested != 0:
            raise ValueError("block_rows must divide the batch size")
        return requested
    # Bound TM so ~8 live (TM, N) f32 temporaries stay under ~24 MiB -- leaves
    # headroom on v7x's 64 MiB VMEM for the resident bf16 xn + pipelining.
    target = max(16, min(256, (24 * 1024 * 1024) // (max(n, 1) * 4 * 8)))
    best = None
    for cand in range(16, min(target, n) + 1, 16):    # bf16 sublane packing: x16
        if n % cand == 0:
            best = cand
    return best if best is not None else n


def npairs_loss(fvec, labels, sigma=0.1, th=0.5, block_rows=None):
    """Pallas implementation of NpairsLoss.forward.

    fvec:   (N, D) float array
    labels: (N,)   int array (Lvec)
    Returns (loss, same_mean, diff_mean) float32 scalars.
    """
    n, d = fvec.shape
    dp = int(pl.cdiv(d, 128)) * 128                   # pad features to lane width
    fvec32 = fvec.astype(jnp.float32)
    if dp != d:
        fvec32 = jnp.pad(fvec32, ((0, 0), (0, dp - d)))

    # --- pass 1: normalize rows + std term, emit bf16 (N, Dp) xn -------------
    prep_need = 16 * n * dp + (4 << 20)
    xn, std_out = pl.pallas_call(
        functools.partial(_prep_kernel, n_valid_cols=d),
        out_shape=(jax.ShapeDtypeStruct((n, dp), jnp.bfloat16),
                   jax.ShapeDtypeStruct((1, 1), jnp.float32)),
        in_specs=[pl.BlockSpec((n, dp), lambda: (0, 0))],
        out_specs=(pl.BlockSpec((n, dp), lambda: (0, 0)),
                   pl.BlockSpec((1, 1), lambda: (0, 0))),
        compiler_params=_compiler_params(prep_need),
    )(fvec32)

    # --- pass 2: row-tiled similarity + masked softmax + threshold stats -----
    tm = _pick_block_rows(n, block_rows)
    num_tiles = n // tm
    lab_col = labels.reshape(n, 1).astype(jnp.int32)
    lab_row = labels.reshape(1, n).astype(jnp.int32)

    main_need = (2 * n * dp * 2                       # resident bf16 xn (x2 bufs)
                 + 2 * tm * dp * 2                    # pipelined LHS row tile
                 + 10 * tm * n * 4                    # live (TM, N) temporaries
                 + 2 * (tm * 128 + 8 * n) * 4         # label blocks (lane/sublane pad)
                 + (4 << 20))
    partials = pl.pallas_call(
        functools.partial(_npairs_tile_kernel, sigma=float(sigma), th=float(th)),
        grid=(num_tiles,),
        out_shape=jax.ShapeDtypeStruct((num_tiles, 8, 128), jnp.float32),
        in_specs=[
            pl.BlockSpec((n, dp), lambda i: (0, 0)),  # full xn (DMA'd once)
            pl.BlockSpec((tm, dp), lambda i: (i, 0)), # this tile's rows (LHS)
            pl.BlockSpec((tm, 1), lambda i: (i, 0)),  # this tile's row labels
            pl.BlockSpec((1, n), lambda i: (0, 0)),   # full label row
        ],
        out_specs=pl.BlockSpec((1, 8, 128), lambda i: (i, 0, 0)),
        compiler_params=_compiler_params(main_need, grid_parallel=True),
    )(xn, xn, lab_col, lab_row)

    std_term = std_out[0, 0]
    loss = jnp.sum(partials[:, 0, 0]) + std_term
    same_hits = jnp.sum(partials[:, 0, 1])
    diff_hits = jnp.sum(partials[:, 0, 2])
    same_cnt = jnp.sum(partials[:, 0, 3])
    diff_cnt = jnp.sum(partials[:, 0, 4])
    # NOTE: degenerate label sets (no positive / no negative pairs) give NaN,
    # exactly like .mean() over an empty selection in the original module.
    same_mean = same_hits / same_cnt
    diff_mean = diff_hits / diff_cnt
    return loss, same_mean, diff_mean


# ---------------------------------------------------------------------------
# Pure-JAX f32 reference mirroring the PyTorch forward
# ---------------------------------------------------------------------------
def _reference(fvec, labels, sigma=0.1, th=0.5):
    n = fvec.shape[0]
    xn = fvec / jnp.linalg.norm(fvec, axis=1, keepdims=True)
    std = jnp.std(xn, axis=0, ddof=1)
    dmat = xn @ xn.T
    eye = jnp.eye(n, dtype=bool)
    dmat = jnp.where(eye, -1.0, dmat)
    same_label = labels[:, None] == labels[None, :]
    same = same_label & ~eye
    diff = ~same_label
    even = (jnp.arange(n) % 2 == 0)[:, None]
    sel = same & even
    neg_logp = -jax.nn.log_softmax(dmat / sigma, axis=1)
    loss = jnp.sum(jnp.where(sel, neg_logp, 0.0)) + jnp.sum(1.0 - std)
    m_sum = (dmat < th).astype(jnp.float32)
    same_mean = jnp.sum(m_sum * same) / jnp.sum(same.astype(jnp.float32))
    diff_mean = jnp.sum(m_sum * diff) / jnp.sum(diff.astype(jnp.float32))
    return loss, same_mean, diff_mean


if __name__ == "__main__":
    key = jax.random.PRNGKey(0)
    n, d = 32, 96             # 16 label pairs, 96-dim embeddings (pads to 128)
    sigma, th = 0.1, 0.5      # NpairsLoss(s=0.1, th=0.5)

    fvec = jax.random.normal(key, (n, d), dtype=jnp.float32)
    labels = jnp.repeat(jnp.arange(n // 2, dtype=jnp.int32), 2)   # Lvec

    out = npairs_loss(fvec, labels, sigma=sigma, th=th, block_rows=16)
    out = jax.block_until_ready(out)

    loss, same_mean, diff_mean = out
    ref_loss, ref_same, ref_diff = _reference(fvec, labels, sigma=sigma, th=th)

    # bf16 MXU operands (f32 accumulate) -> relaxed tolerance on the loss;
    # the threshold/mean statistics match the f32 reference tightly.
    assert jnp.allclose(loss, ref_loss, rtol=3e-2, atol=5e-1), (loss, ref_loss)
    assert jnp.allclose(same_mean, ref_same, rtol=1e-4, atol=1e-4), (same_mean, ref_same)
    assert jnp.allclose(diff_mean, ref_diff, rtol=1e-4, atol=1e-4), (diff_mean, ref_diff)

    print("KERNEL_OK")
</pallas_src>

<mosaic_0001>
module attributes {stable_mosaic.version = 11 : i64} {
  func.func @_prep_kernel(%arg0: memref<32x128xf32, #tpu.memory_space<vmem>>, %arg1: memref<32x128xbf16, #tpu.memory_space<vmem>>, %arg2: memref<1x1xf32, #tpu.memory_space<vmem>>) attributes {dimension_semantics = [], scalar_prefetch = 0 : i64, scratch_operands = 0 : i64, tpu.core_type = #tpu.core_type<tc>} {
    %c0 = arith.constant 0 : index
    %c0_0 = arith.constant 0 : index
    %0 = vector.load %arg0[%c0, %c0_0] : memref<32x128xf32, #tpu.memory_space<vmem>>, vector<32x128xf32>
    %1 = arith.mulf %0, %0 : vector<32x128xf32>
    %cst = arith.constant dense<0.000000e+00> : vector<32xf32>
    %2 = vector.multi_reduction <add>, %1, %cst [1] : vector<32x128xf32> to vector<32xf32>
    %3 = vector.shape_cast %2 : vector<32xf32> to vector<32x1xf32>
    %4 = math.rsqrt %3 : vector<32x1xf32>
    %5 = vector.broadcast %4 : vector<32x1xf32> to vector<32x128xf32>
    %6 = arith.mulf %0, %5 : vector<32x128xf32>
    %7 = arith.truncf %6 : vector<32x128xf32> to vector<32x128xbf16>
    %c0_1 = arith.constant 0 : index
    %c0_2 = arith.constant 0 : index
    %8 = vector.load %arg1[%c0_1, %c0_2] : memref<32x128xbf16, #tpu.memory_space<vmem>>, vector<32x128xbf16>
    tpu.vector_store %arg1[%c0_1, %c0_2], %7 {strides = array<i32>} : memref<32x128xbf16, #tpu.memory_space<vmem>>, vector<32x128xbf16>,
    %cst_3 = arith.constant dense<0.000000e+00> : vector<128xf32>
    %9 = vector.multi_reduction <add>, %6, %cst_3 [0] : vector<32x128xf32> to vector<128xf32>
    %10 = vector.shape_cast %9 : vector<128xf32> to vector<1x128xf32>
    %11 = arith.mulf %6, %6 : vector<32x128xf32>
    %cst_4 = arith.constant dense<0.000000e+00> : vector<128xf32>
    %12 = vector.multi_reduction <add>, %11, %cst_4 [0] : vector<32x128xf32> to vector<128xf32>
    %13 = vector.shape_cast %12 : vector<128xf32> to vector<1x128xf32>
    %cst_5 = arith.constant 1.000000e+00 : f32
    %cst_6 = arith.constant 3.200000e+01 : f32
    %14 = arith.divf %cst_5, %cst_6 : f32
    %15 = vector.broadcast %14 : f32 to vector<1x128xf32>
    %16 = arith.mulf %10, %15 : vector<1x128xf32>
    %cst_7 = arith.constant 3.200000e+01 : f32
    %17 = vector.broadcast %cst_7 : f32 to vector<1x128xf32>
    %18 = arith.mulf %17, %16 : vector<1x128xf32>
    %19 = arith.mulf %18, %16 : vector<1x128xf32>
    %20 = arith.subf %13, %19 : vector<1x128xf32>
    %cst_8 = arith.constant 3.200000e+01 : f32
    %cst_9 = arith.constant 1.000000e+00 : f32
    %21 = arith.subf %cst_8, %cst_9 : f32
    %cst_10 = arith.constant 1.000000e+00 : f32
    %22 = arith.divf %cst_10, %21 : f32
    %23 = vector.broadcast %22 : f32 to vector<1x128xf32>
    %24 = arith.mulf %20, %23 : vector<1x128xf32>
    %cst_11 = arith.constant 0.000000e+00 : f32
    %25 = vector.broadcast %cst_11 : f32 to vector<1x128xf32>
    %26 = arith.maximumf %24, %25 : vector<1x128xf32>
    %27 = math.sqrt %26 : vector<1x128xf32>
    %28 = tpu.iota {dimensions = array<i32: 1>} : vector<1x128xi32>
    %c96_i32 = arith.constant 96 : i32
    %29 = vector.broadcast %c96_i32 : i32 to vector<1x128xi32>
    %30 = arith.cmpi slt, %28, %29 : vector<1x128xi32>
    %cst_12 = arith.constant 1.000000e+00 : f32
    %31 = vector.broadcast %cst_12 : f32 to vector<1x128xf32>
    %32 = arith.subf %31, %27 : vector<1x128xf32>
    %cst_13 = arith.constant 0.000000e+00 : f32
    %33 = vector.broadcast %cst_13 : f32 to vector<1x128xf32>
    %34 = arith.select %30, %32, %33 : vector<1x128xi1>, vector<1x128xf32>
    %35 = vector.shape_cast %34 : vector<1x128xf32> to vector<1x1x128xf32>
    %cst_14 = arith.constant dense<0.000000e+00> : vector<1xf32>
    %36 = vector.multi_reduction <add>, %35, %cst_14 [1, 2] : vector<1x1x128xf32> to vector<1xf32>
    %37 = vector.shape_cast %36 : vector<1xf32> to vector<1x1x1xf32>
    %38 = vector.extract %37[0, 0, 0] : f32 from vector<1x1x1xf32>
    %39 = vector.broadcast %38 : f32 to vector<1x1xf32>
    %c0_15 = arith.constant 0 : index
    %c0_16 = arith.constant 0 : index
    %40 = vector.load %arg2[%c0_15, %c0_16] : memref<1x1xf32, #tpu.memory_space<vmem>>, vector<1x1xf32>
    tpu.vector_store %arg2[%c0_15, %c0_16], %39 {strides = array<i32>} : memref<1x1xf32, #tpu.memory_space<vmem>>, vector<1x1xf32>,
    return
  }
}

</mosaic_0001>

<llo_original>
// kernel: tpu_custom_call.1
$region0: #{tpu_custom_call.1}
  #allocation0 [shape = 'u32[]', space=smem, size = 0x4, offset = 0x4, fixed_abs, tag = 'smem constant byte address 0x4 - core index']
  #allocation1 [shape = 'u32[72,128]{1,0:T(1,128)}', space=vmem, size = 0x9000, scoped, tag = 'internal scratch']
  %s0 = inlined_call_operand.hbm [shape: f32[32,128], index: 0, kind: input, shape index: {}]
  %s1 = inlined_call_operand.hbm [shape: bf16[32,128], index: 1, kind: output, shape index: {0}]
  %s2 = inlined_call_operand.hbm [shape: f32[1,1], index: 2, kind: output, shape index: {1}]
  %3 = xla_tuple %s1, %s2
  %s4 = sld [smem:[#allocation0]]
  $region26: #{tpu_custom_call.1} parent=0
    _
  %s6 = ssub.s32 1, %s4
  %s7 = scalar_select 0, %s6, %s4
  $region1: #{tpu_custom_call.1} parent=0
    #allocation2 [shape = 'u8[16384]{0}', space=vmem, size = 0x4000, scoped, tag = 'input window, operand 0, single buffered']
    #allocation3 [shape = 's32[1]{0}', space=sflag, size = 0x4, scoped, tag = 'scoped memory for tpu_custom_call.1']
    #allocation4 [shape = 's32[1]{0}', space=sflag, size = 0x4, scoped, tag = 'scoped memory for tpu_custom_call.1']
    #allocation5 [shape = 'u8[8192]{0}', space=vmem, size = 0x2000, scoped, tag = 'output window, operand 0, single buffered']
    #allocation6 [shape = 'u8[512]{0}', space=vmem, size = 0x400, scoped, tag = 'output window, operand 1, single buffered']
    #allocation7 [shape = 's32[1]{0}', space=sflag, size = 0x4, scoped, tag = 'scoped memory for tpu_custom_call.1']
    %8 = vsyncpa [#allocation3], 0
    %9 = vsyncpa [#allocation4], 0
    %10 = vsyncpa [#allocation7], 0
    // Predicated region
    $region2: #{tpu_custom_call.1} parent=1 // pred_check
      _
    $region3: #{tpu_custom_call.1} parent=1 // pred_check_branch
      %12 = sbr.rel (0) target = $region5
    $region4: #{tpu_custom_call.1} parent=1 // pred_region
      %14 = vsyncadd [#allocation3], 0
      %s15 = sshll.u32 %s0, 4
      %s16 = int_to_ptr.hbm [resolvable:$true] %s15
      %s17 = sshll.u32 [#allocation2], 4
      %s18 = int_to_ptr.vmem [resolvable:$true] %s17
      %23 = dma.hbm_to_vmem [thread:$0]  %s16, 512, %s18, [#allocation3], 128, 128, 8
    $region5: #{tpu_custom_call.1} parent=1 // pred_fallthru
      _
    // Predicated region
    $region6: #{tpu_custom_call.1} parent=1 // pred_check
      _
    $region7: #{tpu_custom_call.1} parent=1 // pred_check_branch
      %25 = sbr.rel (0) target = $region9
    $region8: #{tpu_custom_call.1} parent=1 // pred_region
      %27 = dma.done [#allocation3], 512
    $region9: #{tpu_custom_call.1} parent=1 // pred_fallthru
      _
    %v28 = vld [vmem:[#allocation2] sm:$0xff]
    %v29 = vld [vmem:[#allocation2 + $0x8] sm:$0xff]
    %v30 = vld [vmem:[#allocation2 + $0x10] sm:$0xff]
    %v31 = vld [vmem:[#allocation2 + $0x18] sm:$0xff]
    %v32 = vmul.f32 %v28, %v28
    %v33 = vmul.f32 %v29, %v29
    %v34 = vmul.f32 %v30, %v30
    %v35 = vmul.f32 %v31, %v31
    %36 = vadd.xlane.f32.xlu0 %v32
    %v37 = vpop.xlane.xlu0 %36
    %38 = vadd.xlane.f32.xlu0 %v33
    %v39 = vpop.xlane.xlu0 %38
    %40 = vadd.xlane.f32.xlu0 %v34
    %v41 = vpop.xlane.xlu0 %40
    %42 = vadd.xlane.f32.xlu0 %v35
    %v43 = vpop.xlane.xlu0 %42
    %v44 = vrsqrt.pop %v37
    %v45 = vmul.f32 %v44, %v37
    %v46 = vmul.f32 %v45, %v44
    %v47 = vmul.f32 0.5, %v46
    %v48 = vsub.f32 1.5, %v47
    %v49 = vmul.f32 %v44, %v48
    %vm50 = vweird.f32 %v37
    %vm51 = vweird.f32 %v44
    %vm52 = vmor %vm50, %vm51
    %v53 = vsel %vm52, %v44, %v49
    %v54 = vrsqrt.pop %v39
    %v55 = vmul.f32 %v54, %v39
    %v56 = vmul.f32 %v55, %v54
    %v57 = vmul.f32 0.5, %v56
    %v58 = vsub.f32 1.5, %v57
    %v59 = vmul.f32 %v54, %v58
    %vm60 = vweird.f32 %v39
    %vm61 = vweird.f32 %v54
    %vm62 = vmor %vm60, %vm61
    %v63 = vsel %vm62, %v54, %v59
    %v64 = vrsqrt.pop %v41
    %v65 = vmul.f32 %v64, %v41
    %v66 = vmul.f32 %v65, %v64
    %v67 = vmul.f32 0.5, %v66
    %v68 = vsub.f32 1.5, %v67
    %v69 = vmul.f32 %v64, %v68
    %vm70 = vweird.f32 %v41
    %vm71 = vweird.f32 %v64
    %vm72 = vmor %vm70, %vm71
    %v73 = vsel %vm72, %v64, %v69
    %v74 = vrsqrt.pop %v43
    %v75 = vmul.f32 %v74, %v43
    %v76 = vmul.f32 %v75, %v74
    %v77 = vmul.f32 0.5, %v76
    %v78 = vsub.f32 1.5, %v77
    %v79 = vmul.f32 %v74, %v78
    %vm80 = vweird.f32 %v43
    %vm81 = vweird.f32 %v74
    %vm82 = vmor %vm80, %vm81
    %v83 = vsel %vm82, %v74, %v79
    %v84 = vmul.f32 %v28, %v53
    %v85 = vmul.f32 %v29, %v63
    %v86 = vmul.f32 %v30, %v73
    %v87 = vmul.f32 %v31, %v83
    %v88 = vpack.c.bf16 %v84, %v84
    %v89 = vpack.c.bf16 %v85, %v85
    %v90 = vpack.c.bf16 %v86, %v86
    %v91 = vpack.c.bf16 %v87, %v87
    %92 = vst [vmem:[#allocation5] sm:$0xf] %v88
    %93 = vst [vmem:[#allocation5 + $0x4] sm:$0xf] %v89
    %94 = vst [vmem:[#allocation5 + $0x8] sm:$0xf] %v90
    %95 = vst [vmem:[#allocation5 + $0xc] sm:$0xf] %v91
    %v96 = vadd.f32 %v84, %v85
    %v97 = vadd.f32 %v96, %v86
    %v98 = vadd.f32 %v97, %v87
    %v99 = vrot.slane %v98, 4
    %v100 = vadd.f32 %v98, %v99
    %v101 = vrot.slane %v100, 2
    %v102 = vadd.f32 %v100, %v101
    %v103 = vrot.slane %v102, 1
    %v104 = vadd.f32 %v102, %v103
    %v105 = vmul.f32 %v84, %v84
    %v106 = vmul.f32 %v85, %v85
    %v107 = vmul.f32 %v86, %v86
    %v108 = vmul.f32 %v87, %v87
    %v109 = vadd.f32 %v105, %v106
    %v110 = vadd.f32 %v109, %v107
    %v111 = vadd.f32 %v110, %v108
    %v112 = vrot.slane %v111, 4
    %v113 = vadd.f32 %v111, %v112
    %v114 = vrot.slane %v113, 2
    %v115 = vadd.f32 %v113, %v114
    %v116 = vrot.slane %v115, 1
    %v117 = vadd.f32 %v115, %v116
    %v118 = vmul.f32 %v104, 0.03125
    %v119 = vmul.f32 %v118, 32.0
    %v120 = vmul.f32 %v119, %v118
    %v121 = vsub.f32 %v117, %v120
    %v122 = vmul.f32 %v121, 0.032258064
    %v123 = vmax.f32 %v122, 0.0
    %v124 = vrsqrt.pop %v123
    %v125 = vmul.f32 %v124, %v123
    %v126 = vmul.f32 %v125, %v124
    %v127 = vmul.f32 0.5, %v126
    %v128 = vsub.f32 1.5, %v127
    %v129 = vmul.f32 %v124, %v128
    %v130 = vmul.f32 %v123, %v129
    %vm131 = vcmp.eq.f32.partialorder %v123, inf
    %v132 = vsel %vm131, %v123, %v130
    %vm133 = vcmp.eq.f32.partialorder %v123, 0.0
    %v134 = vand.u32 %v123, 2147483648
    %v135 = vsel %vm133, %v134, %v132
    %v136 = vlaneseq
    %v137 = vand.u32 %v136, 127
    %vm138 = vcmp.lt.s32.totalorder %v137, 96
    %v139 = vsub.f32 1.0, %v135
    %v140 = vsel %vm138, %v139, 0.0
    %vm141 = vcmask 1040384
    %v142 = vsel %vm141, %v140, 0.0
    %143 = vadd.xlane.f32.xlu0 %v142
    %v144 = vpop.xlane.xlu0 %143
    %v145 = vrot.slane %v144, 4
    %v146 = vadd.f32 %v144, %v145
    %v147 = vrot.slane %v146, 2
    %v148 = vadd.f32 %v146, %v147
    %v149 = vrot.slane %v148, 1
    %v150 = vadd.f32 %v148, %v149
    %s151 = vtos %v150
    %v152 = vstv %s151
    %vm153 = vcmask 0
    %154 = vst.msk [vmem:[#allocation6] sm:$0x1] %vm153, %v152
    // Predicated region
    $region10: #{tpu_custom_call.1} parent=1 // pred_check
      _
    $region11: #{tpu_custom_call.1} parent=1 // pred_check_branch
      %156 = sbr.rel (0) target = $region13
    $region12: #{tpu_custom_call.1} parent=1 // pred_region
      %158 = vsyncadd [#allocation4], 0
      %s159 = sshll.u32 [#allocation5], 4
      %s160 = int_to_ptr.vmem [resolvable:$true] %s159
      %s161 = sshll.u32 %s1, 4
      %s162 = int_to_ptr.hbm [resolvable:$true] %s161
      %167 = dma.vmem_to_hbm [thread:$0]  %s160, 256, %s162, [#allocation4], 64, 64, 4
    $region13: #{tpu_custom_call.1} parent=1 // pred_fallthru
      _
    // Predicated region
    $region14: #{tpu_custom_call.1} parent=1 // pred_check
      _
    $region15: #{tpu_custom_call.1} parent=1 // pred_check_branch
      %169 = sbr.rel (0) target = $region17
    $region16: #{tpu_custom_call.1} parent=1 // pred_region
      %171 = vsyncadd [#allocation7], 0
      %s173 = sshll.u32 [#allocation6], 4
      %s174 = int_to_ptr.vmem [resolvable:$true] %s173
      %s175 = sshll.u32 %s2, 4
      %s176 = int_to_ptr.hbm [resolvable:$true] %s175
      %178 = dma.vmem_to_hbm [thread:$0]  %s174, 16, %s176, [#allocation7]
    $region17: #{tpu_custom_call.1} parent=1 // pred_fallthru
      _
    // Predicated region
    $region18: #{tpu_custom_call.1} parent=1 // pred_check
      _
    $region19: #{tpu_custom_call.1} parent=1 // pred_check_branch
      %180 = sbr.rel (0) target = $region21
    $region20: #{tpu_custom_call.1} parent=1 // pred_region
      %182 = dma.done [#allocation4], 256
    $region21: #{tpu_custom_call.1} parent=1 // pred_fallthru
      _
    // Predicated region
    $region22: #{tpu_custom_call.1} parent=1 // pred_check
      _
    $region23: #{tpu_custom_call.1} parent=1 // pred_check_branch
      %184 = sbr.rel (0) target = $region25
    $region24: #{tpu_custom_call.1} parent=1 // pred_region
      %186 = dma.done [#allocation7], 16
    $region25: #{tpu_custom_call.1} parent=1 // pred_fallthru
      _
    %187 = vsyncpa [#allocation3], 1
    %188 = vsyncpa [#allocation4], 1
    %189 = vsyncpa [#allocation7], 1

</llo_original>
